<compile_context>
chip_gen: v7x
topology: tpu7x:2x2x1
jax: 0.10.0
libtpu: 0.0.40
codegen_flags: <defaults>
</compile_context>

<pallas_src>
import jax
import jax.numpy as jnp
from jax.experimental import pallas as pl
from jax.experimental.pallas import tpu as pltpu

# ---- small, structure-preserving hyper-parameters ---------------------------
VOCAB = 50
PAD_IDX = 0
EMB_DIM = 32        # emb_dim            (orig 100)
N_CONV = 64         # n_conv_units       (orig 1024)
DENSE = 32          # dense_layer_units  (orig 256)
N_CLASSES = 12
FILTER = 3
POOL = 3
BATCH = 2
SEQ_LEN = 64

OUT_ROWS = 8        # sublane-padded batch rows in the output slab
OUT_LANES = 128     # lane-dense class dim (N_CLASSES padded to 128)


def _pool_select_matrix(batch, frame_stride, n_windows, n_cols):
    """0/1 matrix: pooled row b*n_windows+t selects windowed-max row
    b*frame_stride + POOL*t (and thereby skips cross-batch garbage rows)."""
    b = jnp.arange(batch)[:, None]
    t = jnp.arange(n_windows)[None, :]
    idx = (b * frame_stride + POOL * t).reshape(-1)
    return jax.nn.one_hot(idx, n_cols, dtype=jnp.float32)


def base_cnn_forward(emb, params):
    """emb: (B, L, EMB_DIM) float32 -> probs (B, N_CLASSES) float32."""
    w1, b1, w2, b2, w3, b3, wd1, bd1, wd2, bd2 = params
    B, L, E = emb.shape

    # static per-stage sizes (stacked frame = batch elements along the seq axis)
    lo1 = B * L - FILTER + 1               # conv1 output rows (stacked)
    p1 = (L - FILTER + 1) // POOL          # pooled len / batch after block 1
    lo2 = B * p1 - FILTER + 1              # conv2 output rows (stacked)
    p2 = (p1 - FILTER + 1) // POOL         # pooled len / batch after block 2
    lo3 = p2 - FILTER + 1                  # conv3 valid rows per batch

    # ---- kernel-side parameter / input layout -------------------------------
    x = emb.reshape(B * L, E).astype(jnp.bfloat16)                  # (B*L, E)
    w1f = w1.reshape(FILTER * E, N_CONV).astype(jnp.bfloat16)       # (k*Cin, C)
    w2f = w2.reshape(FILTER * N_CONV, N_CONV).astype(jnp.bfloat16)
    w3f = w3.reshape(FILTER * N_CONV, N_CONV).astype(jnp.bfloat16)
    wd2p = jnp.zeros((DENSE, OUT_LANES), jnp.float32).at[:, :N_CLASSES].set(wd2)
    bd2p = jnp.zeros((1, OUT_LANES), jnp.float32).at[:, :N_CLASSES].set(bd2)
    s1 = _pool_select_matrix(B, L, p1, lo1 - POOL + 1)              # (B*p1, lo1-2)
    s2 = _pool_select_matrix(B, p1, p2, lo2 - POOL + 1)             # (B*p2, lo2-2)

    def conv_im2col(xx, w_flat, bias):
        """Valid conv over stacked rows as ONE MXU matmul. xx: (R, Cin) bf16."""
        r = xx.shape[0] - FILTER + 1
        cols = jnp.concatenate([xx[t:t + r, :] for t in range(FILTER)], axis=1)
        return jnp.dot(cols, w_flat, preferred_element_type=jnp.float32) + bias

    def windowed_max(h):
        """out[i] = max(h[i], ..., h[i+POOL-1]): POOL-1 full-tile maximums."""
        r = h.shape[0] - POOL + 1
        m = h[0:r, :]
        for t in range(1, POOL):
            m = jnp.maximum(m, h[t:t + r, :])
        return m

    def kernel(x_ref, s1_ref, s2_ref, w1_ref, b1_ref, w2_ref, b2_ref,
               w3_ref, b3_ref, wd1_ref, bd1_ref, wd2_ref, bd2_ref, out_ref):
        # ConvBlock 1: Conv1d -> ReLU -> MaxPool1d (Dropout = identity)
        h = conv_im2col(x_ref[...], w1_ref[...], b1_ref[...])        # (lo1, C) f32
        h = jnp.maximum(h, 0.0)
        h = jnp.dot(s1_ref[...], windowed_max(h),
                    preferred_element_type=jnp.float32)              # (B*p1, C)

        # ConvBlock 2
        h = conv_im2col(h.astype(jnp.bfloat16), w2_ref[...], b2_ref[...])
        h = jnp.maximum(h, 0.0)
        h = jnp.dot(s2_ref[...], windowed_max(h),
                    preferred_element_type=jnp.float32)              # (B*p2, C)

        # Conv1d + ReLU
        h = conv_im2col(h.astype(jnp.bfloat16), w3_ref[...], b3_ref[...])
        h = jnp.maximum(h, 0.0)                                      # (B*p2-2, C)

        # GlobalMaxPool per batch element (cross-batch rows excluded)
        gb = jnp.concatenate(
            [jnp.max(h[b * p2:b * p2 + lo3, :], axis=0, keepdims=True)
             for b in range(B)], axis=0)                             # (B, C)
        reps = -(-OUT_ROWS // B)
        g = jnp.concatenate([gb] * reps, axis=0)[:OUT_ROWS, :]       # (8, C)

        # Linear -> ReLU -> Linear -> Sigmoid, stored lane-dense as (8, 128)
        d = jnp.dot(g, wd1_ref[...], preferred_element_type=jnp.float32) + bd1_ref[...]
        d = jnp.maximum(d, 0.0)
        logits = (jnp.dot(d, wd2_ref[...], preferred_element_type=jnp.float32)
                  + bd2_ref[...])
        out_ref[...] = 1.0 / (1.0 + jnp.exp(-logits))

    vmem = pl.BlockSpec(memory_space=pltpu.MemorySpace.VMEM)
    out = pl.pallas_call(
        kernel,
        out_shape=jax.ShapeDtypeStruct((OUT_ROWS, OUT_LANES), jnp.float32),
        in_specs=[vmem] * 13,
        out_specs=vmem,
    )(x, s1, s2, w1f, b1, w2f, b2, w3f, b3, wd1, bd1, wd2p, bd2p)
    return out[:B, :N_CLASSES]


# ---- pure-JAX reference (for correctness check only) ------------------------
def reference_forward(emb, params):
    w1, b1, w2, b2, w3, b3, wd1, bd1, wd2, bd2 = params

    def conv(x, w, b):  # x: (B, L, Cin), w: (k, Cin, Cout)
        k = w.shape[0]
        lo = x.shape[1] - k + 1
        acc = sum(jnp.einsum('blc,cd->bld', x[:, t:t + lo, :], w[t])
                  for t in range(k))
        return acc + b[None]

    def pool(x, p):
        lo = x.shape[1] // p
        return x[:, :lo * p, :].reshape(x.shape[0], lo, p, x.shape[2]).max(axis=2)

    h = jax.nn.relu(conv(emb, w1, b1)); h = pool(h, POOL)
    h = jax.nn.relu(conv(h, w2, b2)); h = pool(h, POOL)
    h = jax.nn.relu(conv(h, w3, b3))
    h = h.max(axis=1)                                     # (B, N_CONV)
    h = jax.nn.relu(h @ wd1 + bd1)
    return jax.nn.sigmoid(h @ wd2 + bd2)


# ---- driver ------------------------------------------------------------------
if __name__ == "__main__":
    key = jax.random.PRNGKey(0)
    ks = jax.random.split(key, 12)

    # deterministic synthetic "pretrained" embedding table + tokens
    emb_table = jax.random.normal(ks[0], (VOCAB, EMB_DIM), jnp.float32) * 0.5
    emb_table = emb_table.at[PAD_IDX].set(0.0)
    tokens = jax.random.randint(ks[1], (BATCH, SEQ_LEN), 0, VOCAB)

    def winit(k, shape, fan_in):
        return jax.random.normal(k, shape, jnp.float32) / jnp.sqrt(float(fan_in))

    w1 = winit(ks[2], (FILTER, EMB_DIM, N_CONV), FILTER * EMB_DIM)
    b1 = winit(ks[3], (1, N_CONV), FILTER * EMB_DIM)
    w2 = winit(ks[4], (FILTER, N_CONV, N_CONV), FILTER * N_CONV)
    b2 = winit(ks[5], (1, N_CONV), FILTER * N_CONV)
    w3 = winit(ks[6], (FILTER, N_CONV, N_CONV), FILTER * N_CONV)
    b3 = winit(ks[7], (1, N_CONV), FILTER * N_CONV)
    wd1 = winit(ks[8], (N_CONV, DENSE), N_CONV)
    bd1 = winit(ks[9], (1, DENSE), N_CONV)
    wd2 = winit(ks[10], (DENSE, N_CLASSES), DENSE)
    bd2 = winit(ks[11], (1, N_CLASSES), DENSE)
    params = (w1, b1, w2, b2, w3, b3, wd1, bd1, wd2, bd2)

    # embedding lookup (glue, outside the kernel)
    emb = emb_table[tokens].astype(jnp.float32)           # (B, L, EMB_DIM)

    probs = jax.block_until_ready(base_cnn_forward(emb, params))
    assert probs.shape == (BATCH, N_CLASSES), probs.shape
    assert probs.dtype == jnp.float32

    # f32 reference fed the same bf16-rounded embedding / conv weights the
    # kernel's MXU sees (biases + dense weights stay f32 in both paths).
    rnd = lambda a: a.astype(jnp.bfloat16).astype(jnp.float32)
    ref = jax.block_until_ready(reference_forward(
        rnd(emb), (rnd(w1), b1, rnd(w2), b2, rnd(w3), b3, wd1, bd1, wd2, bd2)))
    assert jnp.allclose(probs, ref, atol=1e-2, rtol=1e-2), (
        f"max abs diff {jnp.max(jnp.abs(probs - ref))}")

    print("KERNEL_OK")
</pallas_src>

<mosaic_0001>
module attributes {stable_mosaic.version = 11 : i64} {
  func.func @kernel(%arg0: memref<128x32xbf16, #tpu.memory_space<vmem>>, %arg1: memref<40x124xf32, #tpu.memory_space<vmem>>, %arg2: memref<12x36xf32, #tpu.memory_space<vmem>>, %arg3: memref<96x64xbf16, #tpu.memory_space<vmem>>, %arg4: memref<1x64xf32, #tpu.memory_space<vmem>>, %arg5: memref<192x64xbf16, #tpu.memory_space<vmem>>, %arg6: memref<1x64xf32, #tpu.memory_space<vmem>>, %arg7: memref<192x64xbf16, #tpu.memory_space<vmem>>, %arg8: memref<1x64xf32, #tpu.memory_space<vmem>>, %arg9: memref<64x32xf32, #tpu.memory_space<vmem>>, %arg10: memref<1x32xf32, #tpu.memory_space<vmem>>, %arg11: memref<32x128xf32, #tpu.memory_space<vmem>>, %arg12: memref<1x128xf32, #tpu.memory_space<vmem>>, %arg13: memref<8x128xf32, #tpu.memory_space<vmem>>) attributes {dimension_semantics = [], scalar_prefetch = 0 : i64, scratch_operands = 0 : i64, tpu.core_type = #tpu.core_type<tc>} {
    %c0 = arith.constant 0 : index
    %c0_0 = arith.constant 0 : index
    %0 = vector.load %arg0[%c0, %c0_0] : memref<128x32xbf16, #tpu.memory_space<vmem>>, vector<128x32xbf16>
    %c0_1 = arith.constant 0 : index
    %c0_2 = arith.constant 0 : index
    %1 = vector.load %arg3[%c0_1, %c0_2] : memref<96x64xbf16, #tpu.memory_space<vmem>>, vector<96x64xbf16>
    %c0_3 = arith.constant 0 : index
    %c0_4 = arith.constant 0 : index
    %2 = vector.load %arg4[%c0_3, %c0_4] : memref<1x64xf32, #tpu.memory_space<vmem>>, vector<1x64xf32>
    %3 = vector.extract_strided_slice %0 {offsets = [0, 0], sizes = [126, 32], strides = [1, 1]} : vector<128x32xbf16> to vector<126x32xbf16>
    %4 = vector.extract_strided_slice %0 {offsets = [1, 0], sizes = [126, 32], strides = [1, 1]} : vector<128x32xbf16> to vector<126x32xbf16>
    %5 = vector.extract_strided_slice %0 {offsets = [2, 0], sizes = [126, 32], strides = [1, 1]} : vector<128x32xbf16> to vector<126x32xbf16>
    %6 = tpu.concatenate %3, %4, %5 in 1 : vector<126x32xbf16>, vector<126x32xbf16>, vector<126x32xbf16> -> vector<126x96xbf16>
    %cst = arith.constant dense<0.000000e+00> : vector<126x64xf32>
    %7 = tpu.matmul %6, %1, %cst {dimension_numbers = #tpu.dot_dimension_numbers<[1], [0], [0], [1], [0, 0, 1, 1], [], []>} : vector<126x96xbf16>, vector<96x64xbf16>, vector<126x64xf32> -> vector<126x64xf32>
    %8 = vector.broadcast %2 : vector<1x64xf32> to vector<126x64xf32>
    %9 = arith.addf %7, %8 : vector<126x64xf32>
    %cst_5 = arith.constant 0.000000e+00 : f32
    %10 = vector.broadcast %cst_5 : f32 to vector<126x64xf32>
    %11 = arith.maximumf %9, %10 : vector<126x64xf32>
    %c0_6 = arith.constant 0 : index
    %c0_7 = arith.constant 0 : index
    %12 = vector.load %arg1[%c0_6, %c0_7] : memref<40x124xf32, #tpu.memory_space<vmem>>, vector<40x124xf32>
    %13 = vector.extract_strided_slice %11 {offsets = [0, 0], sizes = [124, 64], strides = [1, 1]} : vector<126x64xf32> to vector<124x64xf32>
    %14 = vector.extract_strided_slice %11 {offsets = [1, 0], sizes = [124, 64], strides = [1, 1]} : vector<126x64xf32> to vector<124x64xf32>
    %15 = arith.maximumf %13, %14 : vector<124x64xf32>
    %16 = vector.extract_strided_slice %11 {offsets = [2, 0], sizes = [124, 64], strides = [1, 1]} : vector<126x64xf32> to vector<124x64xf32>
    %17 = arith.maximumf %15, %16 : vector<124x64xf32>
    %cst_8 = arith.constant dense<0.000000e+00> : vector<40x64xf32>
    %18 = tpu.matmul %12, %17, %cst_8 {dimension_numbers = #tpu.dot_dimension_numbers<[1], [0], [0], [1], [0, 0, 1, 1], [], []>} : vector<40x124xf32>, vector<124x64xf32>, vector<40x64xf32> -> vector<40x64xf32>
    %19 = arith.truncf %18 : vector<40x64xf32> to vector<40x64xbf16>
    %c0_9 = arith.constant 0 : index
    %c0_10 = arith.constant 0 : index
    %20 = vector.load %arg5[%c0_9, %c0_10] : memref<192x64xbf16, #tpu.memory_space<vmem>>, vector<192x64xbf16>
    %c0_11 = arith.constant 0 : index
    %c0_12 = arith.constant 0 : index
    %21 = vector.load %arg6[%c0_11, %c0_12] : memref<1x64xf32, #tpu.memory_space<vmem>>, vector<1x64xf32>
    %22 = vector.extract_strided_slice %19 {offsets = [0, 0], sizes = [38, 64], strides = [1, 1]} : vector<40x64xbf16> to vector<38x64xbf16>
    %23 = vector.extract_strided_slice %19 {offsets = [1, 0], sizes = [38, 64], strides = [1, 1]} : vector<40x64xbf16> to vector<38x64xbf16>
    %24 = vector.extract_strided_slice %19 {offsets = [2, 0], sizes = [38, 64], strides = [1, 1]} : vector<40x64xbf16> to vector<38x64xbf16>
    %25 = tpu.concatenate %22, %23, %24 in 1 : vector<38x64xbf16>, vector<38x64xbf16>, vector<38x64xbf16> -> vector<38x192xbf16>
    %cst_13 = arith.constant dense<0.000000e+00> : vector<38x64xf32>
    %26 = tpu.matmul %25, %20, %cst_13 {dimension_numbers = #tpu.dot_dimension_numbers<[1], [0], [0], [1], [0, 0, 1, 1], [], []>} : vector<38x192xbf16>, vector<192x64xbf16>, vector<38x64xf32> -> vector<38x64xf32>
    %27 = vector.broadcast %21 : vector<1x64xf32> to vector<38x64xf32>
    %28 = arith.addf %26, %27 : vector<38x64xf32>
    %cst_14 = arith.constant 0.000000e+00 : f32
    %29 = vector.broadcast %cst_14 : f32 to vector<38x64xf32>
    %30 = arith.maximumf %28, %29 : vector<38x64xf32>
    %c0_15 = arith.constant 0 : index
    %c0_16 = arith.constant 0 : index
    %31 = vector.load %arg2[%c0_15, %c0_16] : memref<12x36xf32, #tpu.memory_space<vmem>>, vector<12x36xf32>
    %32 = vector.extract_strided_slice %30 {offsets = [0, 0], sizes = [36, 64], strides = [1, 1]} : vector<38x64xf32> to vector<36x64xf32>
    %33 = vector.extract_strided_slice %30 {offsets = [1, 0], sizes = [36, 64], strides = [1, 1]} : vector<38x64xf32> to vector<36x64xf32>
    %34 = arith.maximumf %32, %33 : vector<36x64xf32>
    %35 = vector.extract_strided_slice %30 {offsets = [2, 0], sizes = [36, 64], strides = [1, 1]} : vector<38x64xf32> to vector<36x64xf32>
    %36 = arith.maximumf %34, %35 : vector<36x64xf32>
    %cst_17 = arith.constant dense<0.000000e+00> : vector<12x64xf32>
    %37 = tpu.matmul %31, %36, %cst_17 {dimension_numbers = #tpu.dot_dimension_numbers<[1], [0], [0], [1], [0, 0, 1, 1], [], []>} : vector<12x36xf32>, vector<36x64xf32>, vector<12x64xf32> -> vector<12x64xf32>
    %38 = arith.truncf %37 : vector<12x64xf32> to vector<12x64xbf16>
    %c0_18 = arith.constant 0 : index
    %c0_19 = arith.constant 0 : index
    %39 = vector.load %arg7[%c0_18, %c0_19] : memref<192x64xbf16, #tpu.memory_space<vmem>>, vector<192x64xbf16>
    %c0_20 = arith.constant 0 : index
    %c0_21 = arith.constant 0 : index
    %40 = vector.load %arg8[%c0_20, %c0_21] : memref<1x64xf32, #tpu.memory_space<vmem>>, vector<1x64xf32>
    %41 = vector.extract_strided_slice %38 {offsets = [0, 0], sizes = [10, 64], strides = [1, 1]} : vector<12x64xbf16> to vector<10x64xbf16>
    %42 = vector.extract_strided_slice %38 {offsets = [1, 0], sizes = [10, 64], strides = [1, 1]} : vector<12x64xbf16> to vector<10x64xbf16>
    %43 = vector.extract_strided_slice %38 {offsets = [2, 0], sizes = [10, 64], strides = [1, 1]} : vector<12x64xbf16> to vector<10x64xbf16>
    %44 = tpu.concatenate %41, %42, %43 in 1 : vector<10x64xbf16>, vector<10x64xbf16>, vector<10x64xbf16> -> vector<10x192xbf16>
    %cst_22 = arith.constant dense<0.000000e+00> : vector<10x64xf32>
    %45 = tpu.matmul %44, %39, %cst_22 {dimension_numbers = #tpu.dot_dimension_numbers<[1], [0], [0], [1], [0, 0, 1, 1], [], []>} : vector<10x192xbf16>, vector<192x64xbf16>, vector<10x64xf32> -> vector<10x64xf32>
    %46 = vector.broadcast %40 : vector<1x64xf32> to vector<10x64xf32>
    %47 = arith.addf %45, %46 : vector<10x64xf32>
    %cst_23 = arith.constant 0.000000e+00 : f32
    %48 = vector.broadcast %cst_23 : f32 to vector<10x64xf32>
    %49 = arith.maximumf %47, %48 : vector<10x64xf32>
    %50 = vector.extract_strided_slice %49 {offsets = [0, 0], sizes = [4, 64], strides = [1, 1]} : vector<10x64xf32> to vector<4x64xf32>
    %cst_24 = arith.constant dense<0xFF800000> : vector<64xf32>
    %51 = vector.multi_reduction <maximumf>, %50, %cst_24 [0] : vector<4x64xf32> to vector<64xf32>
    %52 = vector.shape_cast %51 : vector<64xf32> to vector<1x64xf32>
    %53 = vector.extract_strided_slice %49 {offsets = [6, 0], sizes = [4, 64], strides = [1, 1]} : vector<10x64xf32> to vector<4x64xf32>
    %cst_25 = arith.constant dense<0xFF800000> : vector<64xf32>
    %54 = vector.multi_reduction <maximumf>, %53, %cst_25 [0] : vector<4x64xf32> to vector<64xf32>
    %55 = vector.shape_cast %54 : vector<64xf32> to vector<1x64xf32>
    %56 = tpu.concatenate %52, %55 in 0 : vector<1x64xf32>, vector<1x64xf32> -> vector<2x64xf32>
    %57 = tpu.concatenate %56, %56, %56, %56 in 0 : vector<2x64xf32>, vector<2x64xf32>, vector<2x64xf32>, vector<2x64xf32> -> vector<8x64xf32>
    %c0_26 = arith.constant 0 : index
    %c0_27 = arith.constant 0 : index
    %58 = vector.load %arg9[%c0_26, %c0_27] : memref<64x32xf32, #tpu.memory_space<vmem>>, vector<64x32xf32>
    %cst_28 = arith.constant dense<0.000000e+00> : vector<8x32xf32>
    %59 = tpu.matmul %57, %58, %cst_28 {dimension_numbers = #tpu.dot_dimension_numbers<[1], [0], [0], [1], [0, 0, 1, 1], [], []>} : vector<8x64xf32>, vector<64x32xf32>, vector<8x32xf32> -> vector<8x32xf32>
    %c0_29 = arith.constant 0 : index
    %c0_30 = arith.constant 0 : index
    %60 = vector.load %arg10[%c0_29, %c0_30] : memref<1x32xf32, #tpu.memory_space<vmem>>, vector<1x32xf32>
    %61 = vector.broadcast %60 : vector<1x32xf32> to vector<8x32xf32>
    %62 = arith.addf %59, %61 : vector<8x32xf32>
    %cst_31 = arith.constant 0.000000e+00 : f32
    %63 = vector.broadcast %cst_31 : f32 to vector<8x32xf32>
    %64 = arith.maximumf %62, %63 : vector<8x32xf32>
    %c0_32 = arith.constant 0 : index
    %c0_33 = arith.constant 0 : index
    %65 = vector.load %arg11[%c0_32, %c0_33] : memref<32x128xf32, #tpu.memory_space<vmem>>, vector<32x128xf32>
    %cst_34 = arith.constant dense<0.000000e+00> : vector<8x128xf32>
    %66 = tpu.matmul %64, %65, %cst_34 {dimension_numbers = #tpu.dot_dimension_numbers<[1], [0], [0], [1], [0, 0, 1, 1], [], []>} : vector<8x32xf32>, vector<32x128xf32>, vector<8x128xf32> -> vector<8x128xf32>
    %c0_35 = arith.constant 0 : index
    %c0_36 = arith.constant 0 : index
    %67 = vector.load %arg12[%c0_35, %c0_36] : memref<1x128xf32, #tpu.memory_space<vmem>>, vector<1x128xf32>
    %68 = vector.broadcast %67 : vector<1x128xf32> to vector<8x128xf32>
    %69 = arith.addf %66, %68 : vector<8x128xf32>
    %cst_37 = arith.constant 0.000000e+00 : f32
    %70 = vector.broadcast %cst_37 : f32 to vector<8x128xf32>
    %71 = arith.subf %70, %69 : vector<8x128xf32>
    %72 = math.exp %71 : vector<8x128xf32>
    %cst_38 = arith.constant 1.000000e+00 : f32
    %73 = vector.broadcast %cst_38 : f32 to vector<8x128xf32>
    %74 = arith.addf %73, %72 : vector<8x128xf32>
    %cst_39 = arith.constant 1.000000e+00 : f32
    %75 = vector.broadcast %cst_39 : f32 to vector<8x128xf32>
    %76 = arith.divf %75, %74 : vector<8x128xf32>
    %c0_40 = arith.constant 0 : index
    %c0_41 = arith.constant 0 : index
    %77 = vector.load %arg13[%c0_40, %c0_41] : memref<8x128xf32, #tpu.memory_space<vmem>>, vector<8x128xf32>
    tpu.vector_store %arg13[%c0_40, %c0_41], %76 {strides = array<i32>} : memref<8x128xf32, #tpu.memory_space<vmem>>, vector<8x128xf32>,
    return
  }
}

</mosaic_0001>

<llo_original>
// kernel: tpu_custom_call.1
$region0: #{tpu_custom_call.1}
  #allocation0 [shape = 'u32[]', space=smem, size = 0x4, offset = 0x4, fixed_abs, tag = 'smem constant byte address 0x4 - core index']
  #allocation1 [shape = 'u32[144,128]{1,0:T(1,128)}', space=vmem, size = 0x12000, scoped, tag = 'internal scratch']
  %s0 = inlined_call_operand.vmem [shape: bf16[128,32], index: 0, kind: input, shape index: {}]
  %s1 = inlined_call_operand.vmem [shape: f32[40,124], index: 1, kind: input, shape index: {}]
  %s2 = inlined_call_operand.vmem [shape: f32[12,36], index: 2, kind: input, shape index: {}]
  %s3 = inlined_call_operand.vmem [shape: bf16[96,64], index: 3, kind: input, shape index: {}]
  %s4 = inlined_call_operand.vmem [shape: f32[1,64], index: 4, kind: input, shape index: {}]
  %s5 = inlined_call_operand.vmem [shape: bf16[192,64], index: 5, kind: input, shape index: {}]
  %s6 = inlined_call_operand.vmem [shape: f32[1,64], index: 6, kind: input, shape index: {}]
  %s7 = inlined_call_operand.vmem [shape: bf16[192,64], index: 7, kind: input, shape index: {}]
  %s8 = inlined_call_operand.vmem [shape: f32[1,64], index: 8, kind: input, shape index: {}]
  %s9 = inlined_call_operand.vmem [shape: f32[64,32], index: 9, kind: input, shape index: {}]
  %s10 = inlined_call_operand.vmem [shape: f32[1,32], index: 10, kind: input, shape index: {}]
  %s11 = inlined_call_operand.vmem [shape: f32[32,128], index: 11, kind: input, shape index: {}]
  %s12 = inlined_call_operand.vmem [shape: f32[1,128], index: 12, kind: input, shape index: {}]
  %s13 = inlined_call_operand.hbm [shape: f32[8,128], index: 13, kind: output, shape index: {}]
  %s14 = sld [smem:[#allocation0]]
  $region62: #{tpu_custom_call.1} parent=0
    _
  %s16 = ssub.s32 1, %s14
  %s17 = scalar_select 0, %s16, %s14
  $region1: #{tpu_custom_call.1} parent=0
    #allocation2 [shape = 'u8[4096]{0}', space=vmem, size = 0x1000, scoped, tag = 'output window, operand 0, single buffered']
    #allocation3 [shape = 's32[1]{0}', space=sflag, size = 0x4, scoped, tag = 'scoped memory for tpu_custom_call.1']
    %18 = vsyncpa [#allocation3], 0
    // Predicated region
    $region2: #{tpu_custom_call.1} parent=1 // pred_check
      _
    $region3: #{tpu_custom_call.1} parent=1 // pred_check_branch
      %20 = sbr.rel (0) target = $region5
    $region4: #{tpu_custom_call.1} parent=1 // pred_region
      _
    $region5: #{tpu_custom_call.1} parent=1 // pred_fallthru
      _
    // Predicated region
    $region6: #{tpu_custom_call.1} parent=1 // pred_check
      _
    $region7: #{tpu_custom_call.1} parent=1 // pred_check_branch
      %22 = sbr.rel (0) target = $region9
    $region8: #{tpu_custom_call.1} parent=1 // pred_region
      _
    $region9: #{tpu_custom_call.1} parent=1 // pred_fallthru
      _
    // Predicated region
    $region10: #{tpu_custom_call.1} parent=1 // pred_check
      _
    $region11: #{tpu_custom_call.1} parent=1 // pred_check_branch
      %24 = sbr.rel (0) target = $region13
    $region12: #{tpu_custom_call.1} parent=1 // pred_region
      _
    $region13: #{tpu_custom_call.1} parent=1 // pred_fallthru
      _
    // Predicated region
    $region14: #{tpu_custom_call.1} parent=1 // pred_check
      _
    $region15: #{tpu_custom_call.1} parent=1 // pred_check_branch
      %26 = sbr.rel (0) target = $region17
    $region16: #{tpu_custom_call.1} parent=1 // pred_region
      _
    $region17: #{tpu_custom_call.1} parent=1 // pred_fallthru
      _
    // Predicated region
    $region18: #{tpu_custom_call.1} parent=1 // pred_check
      _
    $region19: #{tpu_custom_call.1} parent=1 // pred_check_branch
      %28 = sbr.rel (0) target = $region21
    $region20: #{tpu_custom_call.1} parent=1 // pred_region
      _
    $region21: #{tpu_custom_call.1} parent=1 // pred_fallthru
      _
    // Predicated region
    $region22: #{tpu_custom_call.1} parent=1 // pred_check
      _
    $region23: #{tpu_custom_call.1} parent=1 // pred_check_branch
      %30 = sbr.rel (0) target = $region25
    $region24: #{tpu_custom_call.1} parent=1 // pred_region
      _
    $region25: #{tpu_custom_call.1} parent=1 // pred_fallthru
      _
    // Predicated region
    $region26: #{tpu_custom_call.1} parent=1 // pred_check
      _
    $region27: #{tpu_custom_call.1} parent=1 // pred_check_branch
      %32 = sbr.rel (0) target = $region29
    $region28: #{tpu_custom_call.1} parent=1 // pred_region
      _
    $region29: #{tpu_custom_call.1} parent=1 // pred_fallthru
      _
    // Predicated region
    $region30: #{tpu_custom_call.1} parent=1 // pred_check
      _
    $region31: #{tpu_custom_call.1} parent=1 // pred_check_branch
      %34 = sbr.rel (0) target = $region33
    $region32: #{tpu_custom_call.1} parent=1 // pred_region
      _
    $region33: #{tpu_custom_call.1} parent=1 // pred_fallthru
      _
    // Predicated region
    $region34: #{tpu_custom_call.1} parent=1 // pred_check
      _
    $region35: #{tpu_custom_call.1} parent=1 // pred_check_branch
      %36 = sbr.rel (0) target = $region37
    $region36: #{tpu_custom_call.1} parent=1 // pred_region
      _
    $region37: #{tpu_custom_call.1} parent=1 // pred_fallthru
      _
    // Predicated region
    $region38: #{tpu_custom_call.1} parent=1 // pred_check
      _
    $region39: #{tpu_custom_call.1} parent=1 // pred_check_branch
      %38 = sbr.rel (0) target = $region41
    $region40: #{tpu_custom_call.1} parent=1 // pred_region
      _
    $region41: #{tpu_custom_call.1} parent=1 // pred_fallthru
      _
    // Predicated region
    $region42: #{tpu_custom_call.1} parent=1 // pred_check
      _
    $region43: #{tpu_custom_call.1} parent=1 // pred_check_branch
      %40 = sbr.rel (0) target = $region45
    $region44: #{tpu_custom_call.1} parent=1 // pred_region
      _
    $region45: #{tpu_custom_call.1} parent=1 // pred_fallthru
      _
    // Predicated region
    $region46: #{tpu_custom_call.1} parent=1 // pred_check
      _
    $region47: #{tpu_custom_call.1} parent=1 // pred_check_branch
      %42 = sbr.rel (0) target = $region49
    $region48: #{tpu_custom_call.1} parent=1 // pred_region
      _
    $region49: #{tpu_custom_call.1} parent=1 // pred_fallthru
      _
    // Predicated region
    $region50: #{tpu_custom_call.1} parent=1 // pred_check
      _
    $region51: #{tpu_custom_call.1} parent=1 // pred_check_branch
      %44 = sbr.rel (0) target = $region53
    $region52: #{tpu_custom_call.1} parent=1 // pred_region
      _
    $region53: #{tpu_custom_call.1} parent=1 // pred_fallthru
      _
    %v46 = vld [vmem:[%s0] sm:$0xf]
    %v47 = vld [vmem:[%s0 + $0x4] sm:$0xf]
    %v48 = vld [vmem:[%s0 + $0x8] sm:$0xf]
    %v49 = vld [vmem:[%s0 + $0xc] sm:$0xf]
    %v50 = vld [vmem:[%s0 + $0x10] sm:$0xf]
    %v51 = vld [vmem:[%s0 + $0x14] sm:$0xf]
    %v52 = vld [vmem:[%s0 + $0x18] sm:$0xf]
    %v53 = vld [vmem:[%s0 + $0x1c] sm:$0xf]
    %v54 = vld [vmem:[%s0 + $0x20] sm:$0xf]
    %v55 = vld [vmem:[%s0 + $0x24] sm:$0xf]
    %v56 = vld [vmem:[%s0 + $0x28] sm:$0xf]
    %v57 = vld [vmem:[%s0 + $0x2c] sm:$0xf]
    %v58 = vld [vmem:[%s0 + $0x30] sm:$0xf]
    %v59 = vld [vmem:[%s0 + $0x34] sm:$0xf]
    %v60 = vld [vmem:[%s0 + $0x38] sm:$0xf]
    %v61 = vld [vmem:[%s0 + $0x3c] sm:$0xf]
    %v62 = vld [vmem:[%s3] sm:$0xf]
    %v63 = vld [vmem:[%s3 + $0x4] sm:$0xf]
    %v64 = vld [vmem:[%s3 + $0x8] sm:$0xf]
    %v65 = vld [vmem:[%s3 + $0xc] sm:$0xf]
    %v66 = vld [vmem:[%s3 + $0x10] sm:$0xf]
    %v67 = vld [vmem:[%s3 + $0x14] sm:$0xf]
    %v68 = vld [vmem:[%s3 + $0x18] sm:$0xf]
    %v69 = vld [vmem:[%s3 + $0x1c] sm:$0xf]
    %v70 = vld [vmem:[%s3 + $0x20] sm:$0xf]
    %v71 = vld [vmem:[%s3 + $0x24] sm:$0xf]
    %v72 = vld [vmem:[%s3 + $0x28] sm:$0xf]
    %v73 = vld [vmem:[%s3 + $0x2c] sm:$0xf]
    %v74 = vld [vmem:[%s4] sm:$0x1]
    %v91 = vunpack.c.l.b16 %v46
    %v92 = vunpack.c.l.b16 %v47
    %v93 = vunpack.c.l.b16 %v48
    %v94 = vunpack.c.l.b16 %v49
    %v95 = vunpack.c.l.b16 %v50
    %v96 = vunpack.c.l.b16 %v51
    %v97 = vunpack.c.l.b16 %v52
    %v98 = vunpack.c.l.b16 %v53
    %v99 = vunpack.c.l.b16 %v54
    %v100 = vunpack.c.l.b16 %v55
    %v101 = vunpack.c.l.b16 %v56
    %v102 = vunpack.c.l.b16 %v57
    %v103 = vunpack.c.l.b16 %v58
    %v104 = vunpack.c.l.b16 %v59
    %v105 = vunpack.c.l.b16 %v60
    %v106 = vunpack.c.l.b16 %v61
    %v107 = vpack.c.b16 %v92, %v91
    %v108 = vpack.c.b16 %v94, %v93
    %v109 = vpack.c.b16 %v96, %v95
    %v110 = vpack.c.b16 %v98, %v97
    %v111 = vpack.c.b16 %v100, %v99
    %v112 = vpack.c.b16 %v102, %v101
    %v113 = vpack.c.b16 %v104, %v103
    %v114 = vpack.c.b16 %v106, %v105
    %vm115 = vsmask.f32 7424
    %v117 = vshrl.u32 %v107, 16
    %v119 = vshll.u32 %v107, 16
    %v121 = vrot.slane %v119, 1
    %v122 = vor.u32 %v117, %v121
    %v124 = vshll.u32 %v108, 16
    %v126 = vrot.slane %v124, 1
    %v127 = vsel %vm115, %v122, %v126
    %v128 = vshrl.u32 %v108, 16
    %v130 = vor.u32 %v128, %v126
    %v132 = vshll.u32 %v109, 16
    %v134 = vrot.slane %v132, 1
    %v135 = vsel %vm115, %v130, %v134
    %v136 = vshrl.u32 %v109, 16
    %v138 = vor.u32 %v136, %v134
    %v140 = vshll.u32 %v110, 16
    %v142 = vrot.slane %v140, 1
    %v143 = vsel %vm115, %v138, %v142
    %v144 = vshrl.u32 %v110, 16
    %v146 = vor.u32 %v144, %v142
    %v148 = vshll.u32 %v111, 16
    %v150 = vrot.slane %v148, 1
    %v151 = vsel %vm115, %v146, %v150
    %v152 = vshrl.u32 %v111, 16
    %v154 = vor.u32 %v152, %v150
    %v156 = vshll.u32 %v112, 16
    %v158 = vrot.slane %v156, 1
    %v159 = vsel %vm115, %v154, %v158
    %v160 = vshrl.u32 %v112, 16
    %v162 = vor.u32 %v160, %v158
    %v164 = vshll.u32 %v113, 16
    %v166 = vrot.slane %v164, 1
    %v167 = vsel %vm115, %v162, %v166
    %v168 = vshrl.u32 %v113, 16
    %v170 = vor.u32 %v168, %v166
    %v172 = vshll.u32 %v114, 16
    %v174 = vrot.slane %v172, 1
    %v175 = vsel %vm115, %v170, %v174
    %v176 = vshrl.u32 %v114, 16
    %v178 = vor.u32 %v176, %v174
    %179 = vrot.lane.b32.xlu0 %v127, 32
    %v180 = vpop.permute.xlu0 %179
    %181 = vrot.lane.b32.xlu0 %v135, 32
    %v182 = vpop.permute.xlu0 %181
    %183 = vrot.lane.b32.xlu0 %v143, 32
    %v184 = vpop.permute.xlu0 %183
    %185 = vrot.lane.b32.xlu0 %v151, 32
    %v186 = vpop.permute.xlu0 %185
    %187 = vrot.lane.b32.xlu0 %v159, 32
    %v188 = vpop.permute.xlu0 %187
    %189 = vrot.lane.b32.xlu0 %v167, 32
    %v190 = vpop.permute.xlu0 %189
    %191 = vrot.lane.b32.xlu0 %v175, 32
    %v192 = vpop.permute.xlu0 %191
    %193 = vrot.lane.b32.xlu0 %v178, 32
    %v194 = vpop.permute.xlu0 %193
    %vm195 = vcmask 1046528
    %v196 = vrot.slane %v107, 1
    %v197 = vrot.slane %v108, 1
    %v198 = vsel %vm195, %v196, %v197
    %v199 = vrot.slane %v109, 1
    %v200 = vsel %vm195, %v197, %v199
    %v201 = vrot.slane %v110, 1
    %v202 = vsel %vm195, %v199, %v201
    %v203 = vrot.slane %v111, 1
    %v204 = vsel %vm195, %v201, %v203
    %v205 = vrot.slane %v112, 1
    %v206 = vsel %vm195, %v203, %v205
    %v207 = vrot.slane %v113, 1
    %v208 = vsel %vm195, %v205, %v207
    %v209 = vrot.slane %v114, 1
    %v210 = vsel %vm195, %v207, %v209
    %211 = vrot.lane.b32.xlu0 %v198, 64
    %v212 = vpop.permute.xlu0 %211
    %213 = vrot.lane.b32.xlu0 %v200, 64
    %v214 = vpop.permute.xlu0 %213
    %215 = vrot.lane.b32.xlu0 %v202, 64
    %v216 = vpop.permute.xlu0 %215
    %217 = vrot.lane.b32.xlu0 %v204, 64
    %v218 = vpop.permute.xlu0 %217
    %219 = vrot.lane.b32.xlu0 %v206, 64
    %v220 = vpop.permute.xlu0 %219
    %221 = vrot.lane.b32.xlu0 %v208, 64
    %v222 = vpop.permute.xlu0 %221
    %223 = vrot.lane.b32.xlu0 %v210, 64
    %v224 = vpop.permute.xlu0 %223
    %225 = vrot.lane.b32.xlu0 %v209, 64
    %v226 = vpop.permute.xlu0 %225
    %vm227 = vcmask 261120
    %v229 = vsel %vm227, %v107, %v180
    %v231 = vsel %vm227, %v108, %v182
    %v233 = vsel %vm227, %v109, %v184
    %v235 = vsel %vm227, %v110, %v186
    %v237 = vsel %vm227, %v111, %v188
    %v239 = vsel %vm227, %v112, %v190
    %v241 = vsel %vm227, %v113, %v192
    %v243 = vsel %vm227, %v114, %v194
    %vm244 = vcmask 523264
    %v246 = vsel %vm244, %v229, %v212
    %v248 = vsel %vm244, %v231, %v214
    %v250 = vsel %vm244, %v233, %v216
    %v252 = vsel %vm244, %v235, %v218
    %v254 = vsel %vm244, %v237, %v220
    %v256 = vsel %vm244, %v239, %v222
    %v258 = vsel %vm244, %v241, %v224
    %v260 = vsel %vm244, %v243, %v226
    %v262 = vlaneseq
    %v263 = vshrl.u32 %v262, 7
    %v264 = vsub.s32 0, %v263
    %v265 = vrot.slane %v74, %v264
    %v279 = vunpack.c.l.b16 %v62
    %v280 = vunpack.c.l.b16 %v63
    %v281 = vunpack.c.l.b16 %v64
    %v282 = vunpack.c.l.b16 %v65
    %v283 = vunpack.c.l.b16 %v66
    %v284 = vunpack.c.l.b16 %v67
    %v285 = vunpack.c.l.b16 %v68
    %v286 = vunpack.c.l.b16 %v69
    %v287 = vunpack.c.l.b16 %v70
    %v288 = vunpack.c.l.b16 %v71
    %v289 = vunpack.c.l.b16 %v72
    %v290 = vunpack.c.l.b16 %v73
    %v291 = vpack.c.b16 %v280, %v279
    %v292 = vpack.c.b16 %v282, %v281
    %v293 = vpack.c.b16 %v284, %v283
    %v294 = vpack.c.b16 %v286, %v285
    %v295 = vpack.c.b16 %v288, %v287
    %v296 = vpack.c.b16 %v290, %v289
    %vm303 = vcmask 785408
    %v304 = vsel %vm303, %v246, 0
    %v306 = vsel %vm303, %v248, 0
    %v308 = vsel %vm303, %v250, 0
    %v310 = vsel %vm303, %v252, 0
    %v312 = vsel %vm303, %v254, 0
    %v314 = vsel %vm303, %v256, 0
    %v316 = vsel %vm303, %v258, 0
    %v318 = vsel %vm303, %v260, 0
    %320 = vmatprep.subr.bf16.mxu0 0
    %321 = vmatpush1.bf16.msra.mxu0 %v291
    %322 = vmatprep.subr.bf16.mxu0 0
    %323 = vmatpush1.bf16.msra.mxu0 %v292
    %324 = vmatprep.subr.bf16.mxu0 0
    %325 = vmatpush1.bf16.msra.mxu0 %v293
    %326 = vmatprep.subr.bf16.mxu0 0
    %327 = vmatpush1.bf16.msra.mxu0 %v294
    %328 = vmatprep.subr.bf16.mxu0 0
    %329 = vmatpush1.bf16.msra.mxu0 %v295
    %330 = vmatprep.subr.bf16.mxu0 0
    %331 = vmatpush1.bf16.msra.mxu0 %v296
    %332 = vmatprep.subr.bf16.mxu0 0
    %333 = vmatpush1.bf16.msra.mxu0 0
    %334 = vmatprep.subr.bf16.mxu0 0
    %335 = vmatpush1.bf16.msra.mxu0 0
    %336 = vmatprep.subr.bf16.mxu0 0
    %337 = vmatpush1.bf16.msra.mxu0 0
    %338 = vmatprep.subr.bf16.mxu0 0
    %339 = vmatpush1.bf16.msra.mxu0 0
    %340 = vmatprep.subr.bf16.mxu0 0
    %341 = vmatpush1.bf16.msra.mxu0 0
    %342 = vmatprep.subr.bf16.mxu0 0
    %343 = vmatpush1.bf16.msra.mxu0 0
    %344 = vmatprep.subr.bf16.mxu0 0
    %345 = vmatpush1.bf16.msra.mxu0 0
    %346 = vmatprep.subr.bf16.mxu0 0
    %347 = vmatpush1.bf16.msra.mxu0 0
    %348 = vmatprep.subr.bf16.mxu0 0
    %349 = vmatpush1.bf16.msra.mxu0 0
    %350 = vmatprep.subr.bf16.mxu0 0
    %351 = vmatpush1.bf16.msra.mxu0 0
    %352 = vmatprep.mubr.bf16.mxu0 0
    %353 = vmatmul.mubr.bf16.gmra.mrb[0].mxu0 %v304
    %v354 = vpop.f32.mrb[0].mxu0
    %v355 = vadd.f32 %v265, %v354
    %v356 = vpop.f32.mrb[0].mxu0
    %v357 = vpop.f32.mrb[0].mxu0
    %v358 = vadd.f32 %v265, %v357
    %v359 = vpop.f32.mrb[0].mxu0
    %360 = vmatprep.mubr.bf16.mxu0 0
    %361 = vmatmul.mubr.bf16.gmra.mrb[0].mxu0 %v306
    %v362 = vpop.f32.mrb[0].mxu0
    %v363 = vadd.f32 %v265, %v362
    %v364 = vpop.f32.mrb[0].mxu0
    %v365 = vpop.f32.mrb[0].mxu0
    %v366 = vadd.f32 %v265, %v365
    %v367 = vpop.f32.mrb[0].mxu0
    %368 = vmatprep.mubr.bf16.mxu0 0
    %369 = vmatmul.mubr.bf16.gmra.mrb[0].mxu0 %v308
    %v370 = vpop.f32.mrb[0].mxu0
    %v371 = vadd.f32 %v265, %v370
    %v372 = vpop.f32.mrb[0].mxu0
    %v373 = vpop.f32.mrb[0].mxu0
    %v374 = vadd.f32 %v265, %v373
    %v375 = vpop.f32.mrb[0].mxu0
    %376 = vmatprep.mubr.bf16.mxu0 0
    %377 = vmatmul.mubr.bf16.gmra.mrb[0].mxu0 %v310
    %v378 = vpop.f32.mrb[0].mxu0
    %v379 = vadd.f32 %v265, %v378
    %v380 = vpop.f32.mrb[0].mxu0
    %v381 = vpop.f32.mrb[0].mxu0
    %v382 = vadd.f32 %v265, %v381
    %v383 = vpop.f32.mrb[0].mxu0
    %384 = vmatprep.mubr.bf16.mxu0 0
    %385 = vmatmul.mubr.bf16.gmra.mrb[0].mxu0 %v312
    %v386 = vpop.f32.mrb[0].mxu0
    %v387 = vadd.f32 %v265, %v386
    %v388 = vpop.f32.mrb[0].mxu0
    %v389 = vpop.f32.mrb[0].mxu0
    %v390 = vadd.f32 %v265, %v389
    %v391 = vpop.f32.mrb[0].mxu0
    %392 = vmatprep.mubr.bf16.mxu0 0
    %393 = vmatmul.mubr.bf16.gmra.mrb[0].mxu0 %v314
    %v394 = vpop.f32.mrb[0].mxu0
    %v395 = vadd.f32 %v265, %v394
    %v396 = vpop.f32.mrb[0].mxu0
    %v397 = vpop.f32.mrb[0].mxu0
    %v398 = vadd.f32 %v265, %v397
    %v399 = vpop.f32.mrb[0].mxu0
    %400 = vmatprep.mubr.bf16.mxu0 0
    %401 = vmatmul.mubr.bf16.gmra.mrb[0].mxu0 %v316
    %v402 = vpop.f32.mrb[0].mxu0
    %v403 = vadd.f32 %v265, %v402
    %v404 = vpop.f32.mrb[0].mxu0
    %v405 = vpop.f32.mrb[0].mxu0
    %v406 = vadd.f32 %v265, %v405
    %v407 = vpop.f32.mrb[0].mxu0
    %408 = vmatprep.mubr.bf16.mxu0 0
    %409 = vmatmul.mubr.bf16.gmra.mrb[0].mxu0 %v318
    %v410 = vpop.f32.mrb[0].mxu0
    %v411 = vadd.f32 %v265, %v410
    %v412 = vpop.f32.mrb[0].mxu0
    %v413 = vpop.f32.mrb[0].mxu0
    %v414 = vadd.f32 %v265, %v413
    %v415 = vpop.f32.mrb[0].mxu0
    %416 = vdwg.mxu0
    %v417 = vmax.f32 %v355, 0.0
    %v418 = vmax.f32 %v358, 0.0
    %v419 = vmax.f32 %v363, 0.0
    %v420 = vmax.f32 %v366, 0.0
    %v421 = vmax.f32 %v371, 0.0
    %v422 = vmax.f32 %v374, 0.0
    %v423 = vmax.f32 %v379, 0.0
    %v424 = vmax.f32 %v382, 0.0
    %v425 = vmax.f32 %v387, 0.0
    %v426 = vmax.f32 %v390, 0.0
    %v427 = vmax.f32 %v395, 0.0
    %v428 = vmax.f32 %v398, 0.0
    %v429 = vmax.f32 %v403, 0.0
    %v430 = vmax.f32 %v406, 0.0
    %v431 = vmax.f32 %v411, 0.0
    %v432 = vmax.f32 %v414, 0.0
    %v433 = vld [vmem:[%s1] sm:$0xff]
    %v434 = vld [vmem:[%s1 + $0x8] sm:$0xff]
    %v435 = vld [vmem:[%s1 + $0x10] sm:$0xff]
    %v436 = vld [vmem:[%s1 + $0x18] sm:$0xff]
    %v437 = vld [vmem:[%s1 + $0x20] sm:$0xff]
    %vm454 = vcmask 1046528
    %v455 = vrot.slane %v417, 1
    %v456 = vrot.slane %v418, 1
    %v457 = vsel %vm454, %v455, %v456
    %v458 = vrot.slane %v419, 1
    %v459 = vsel %vm454, %v456, %v458
    %v460 = vrot.slane %v420, 1
    %v461 = vsel %vm454, %v458, %v460
    %v462 = vrot.slane %v421, 1
    %v463 = vsel %vm454, %v460, %v462
    %v464 = vrot.slane %v422, 1
    %v465 = vsel %vm454, %v462, %v464
    %v466 = vrot.slane %v423, 1
    %v467 = vsel %vm454, %v464, %v466
    %v468 = vrot.slane %v424, 1
    %v469 = vsel %vm454, %v466, %v468
    %v470 = vrot.slane %v425, 1
    %v471 = vsel %vm454, %v468, %v470
    %v472 = vrot.slane %v426, 1
    %v473 = vsel %vm454, %v470, %v472
    %v474 = vrot.slane %v427, 1
    %v475 = vsel %vm454, %v472, %v474
    %v476 = vrot.slane %v428, 1
    %v477 = vsel %vm454, %v474, %v476
    %v478 = vrot.slane %v429, 1
    %v479 = vsel %vm454, %v476, %v478
    %v480 = vrot.slane %v430, 1
    %v481 = vsel %vm454, %v478, %v480
    %v482 = vrot.slane %v431, 1
    %v483 = vsel %vm454, %v480, %v482
    %v484 = vrot.slane %v432, 1
    %v485 = vsel %vm454, %v482, %v484
    %v502 = vmax.f32 %v417, %v457
    %v503 = vmax.f32 %v418, %v459
    %v504 = vmax.f32 %v419, %v461
    %v505 = vmax.f32 %v420, %v463
    %v506 = vmax.f32 %v421, %v465
    %v507 = vmax.f32 %v422, %v467
    %v508 = vmax.f32 %v423, %v469
    %v509 = vmax.f32 %v424, %v471
    %v510 = vmax.f32 %v425, %v473
    %v511 = vmax.f32 %v426, %v475
    %v512 = vmax.f32 %v427, %v477
    %v513 = vmax.f32 %v428, %v479
    %v514 = vmax.f32 %v429, %v481
    %v515 = vmax.f32 %v430, %v483
    %v516 = vmax.f32 %v431, %v485
    %v517 = vmax.f32 %v432, %v484
    %vm518 = vcmask 1045504
    %v519 = vrot.slane %v417, 2
    %v520 = vrot.slane %v418, 2
    %v521 = vsel %vm518, %v519, %v520
    %v522 = vrot.slane %v419, 2
    %v523 = vsel %vm518, %v520, %v522
    %v524 = vrot.slane %v420, 2
    %v525 = vsel %vm518, %v522, %v524
    %v526 = vrot.slane %v421, 2
    %v527 = vsel %vm518, %v524, %v526
    %v528 = vrot.slane %v422, 2
    %v529 = vsel %vm518, %v526, %v528
    %v530 = vrot.slane %v423, 2
    %v531 = vsel %vm518, %v528, %v530
    %v532 = vrot.slane %v424, 2
    %v533 = vsel %vm518, %v530, %v532
    %v534 = vrot.slane %v425, 2
    %v535 = vsel %vm518, %v532, %v534
    %v536 = vrot.slane %v426, 2
    %v537 = vsel %vm518, %v534, %v536
    %v538 = vrot.slane %v427, 2
    %v539 = vsel %vm518, %v536, %v538
    %v540 = vrot.slane %v428, 2
    %v541 = vsel %vm518, %v538, %v540
    %v542 = vrot.slane %v429, 2
    %v543 = vsel %vm518, %v540, %v542
    %v544 = vrot.slane %v430, 2
    %v545 = vsel %vm518, %v542, %v544
    %v546 = vrot.slane %v431, 2
    %v547 = vsel %vm518, %v544, %v546
    %v548 = vrot.slane %v432, 2
    %v549 = vsel %vm518, %v546, %v548
    %v566 = vmax.f32 %v502, %v521
    %v567 = vmax.f32 %v503, %v523
    %v568 = vmax.f32 %v504, %v525
    %v569 = vmax.f32 %v505, %v527
    %v570 = vmax.f32 %v506, %v529
    %v571 = vmax.f32 %v507, %v531
    %v572 = vmax.f32 %v508, %v533
    %v573 = vmax.f32 %v509, %v535
    %v574 = vmax.f32 %v510, %v537
    %v575 = vmax.f32 %v511, %v539
    %v576 = vmax.f32 %v512, %v541
    %v577 = vmax.f32 %v513, %v543
    %v578 = vmax.f32 %v514, %v545
    %v579 = vmax.f32 %v515, %v547
    %v580 = vmax.f32 %v516, %v549
    %v581 = vmax.f32 %v517, %v548
    %vm582 = vcmask 1014784
    %v584 = vsel %vm582, %v433, 0
    %v587 = vsel %vm582, %v434, 0
    %v590 = vsel %vm582, %v435, 0
    %v593 = vsel %vm582, %v436, 0
    %v596 = vsel %vm582, %v437, 0
    %vm598 = vcmask 1043456
    %v600 = vsel %vm598, %v581, 0
    %602 = vmatprep.subr.mxu0 0.0
    %603 = vmatpush1.msra.mxu0 %v566
    %604 = vmatprep.subr.mxu0 0.0
    %605 = vmatpush1.msra.mxu0 %v567
    %606 = vmatprep.subr.mxu0 0.0
    %607 = vmatpush1.msra.mxu0 %v568
    %608 = vmatprep.subr.mxu0 0.0
    %609 = vmatpush1.msra.mxu0 %v569
    %610 = vmatprep.subr.mxu0 0.0
    %611 = vmatpush1.msra.mxu0 %v570
    %612 = vmatprep.subr.mxu0 0.0
    %613 = vmatpush1.msra.mxu0 %v571
    %614 = vmatprep.subr.mxu0 0.0
    %615 = vmatpush1.msra.mxu0 %v572
    %616 = vmatprep.subr.mxu0 0.0
    %617 = vmatpush1.msra.mxu0 %v573
    %618 = vmatprep.subr.mxu0 0.0
    %619 = vmatpush1.msra.mxu0 %v574
    %620 = vmatprep.subr.mxu0 0.0
    %621 = vmatpush1.msra.mxu0 %v575
    %622 = vmatprep.subr.mxu0 0.0
    %623 = vmatpush1.msra.mxu0 %v576
    %624 = vmatprep.subr.mxu0 0.0
    %625 = vmatpush1.msra.mxu0 %v577
    %626 = vmatprep.subr.mxu0 0.0
    %627 = vmatpush1.msra.mxu0 %v578
    %628 = vmatprep.subr.mxu0 0.0
    %629 = vmatpush1.msra.mxu0 %v579
    %630 = vmatprep.subr.mxu0 0.0
    %631 = vmatpush1.msra.mxu0 %v580
    %632 = vmatprep.subr.mxu0 0.0
    %633 = vmatpush1.msra.mxu0 %v600
    %634 = vmatprep.subr.mxu0 0.0
    %635 = vmatpush1.msra.mxu0 0.0
    %636 = vmatprep.subr.mxu0 0.0
    %637 = vmatpush1.msra.mxu0 0.0
    %638 = vmatprep.subr.mxu0 0.0
    %639 = vmatpush1.msra.mxu0 0.0
    %640 = vmatprep.subr.mxu0 0.0
    %641 = vmatpush1.msra.mxu0 0.0
    %642 = vmatprep.subr.mxu0 0.0
    %643 = vmatpush1.msra.mxu0 0.0
    %644 = vmatprep.subr.mxu0 0.0
    %645 = vmatpush1.msra.mxu0 0.0
    %646 = vmatprep.subr.mxu0 0.0
    %647 = vmatpush1.msra.mxu0 0.0
    %648 = vmatprep.subr.mxu0 0.0
    %649 = vmatpush1.msra.mxu0 0.0
    %650 = vmatprep.subr.mxu0 0.0
    %651 = vmatpush1.msra.mxu0 0.0
    %652 = vmatprep.subr.mxu0 0.0
    %653 = vmatpush1.msra.mxu0 0.0
    %654 = vmatprep.subr.mxu0 0.0
    %655 = vmatpush1.msra.mxu0 0.0
    %656 = vmatprep.subr.mxu0 0.0
    %657 = vmatpush1.msra.mxu0 0.0
    %658 = vmatprep.subr.mxu0 0.0
    %659 = vmatpush1.msra.mxu0 0.0
    %660 = vmatprep.subr.mxu0 0.0
    %661 = vmatpush1.msra.mxu0 0.0
    %662 = vmatprep.subr.mxu0 0.0
    %663 = vmatpush1.msra.mxu0 0.0
    %664 = vmatprep.subr.mxu0 0.0
    %665 = vmatpush1.msra.mxu0 0.0
    %666 = vmatprep.mubr.f32.mxu0 0.0
    %667 = vmatmul.mubr.f32.gmra.mrb[0].mxu0 %v584
    %v668 = vpop.f32.mrb[0].mxu0
    %v669 = vadd.f32 0.0, %v668
    %v670 = vpop.f32.mrb[0].mxu0
    %671 = vmatprep.mubr.f32.mxu0 0.0
    %672 = vmatmul.mubr.f32.gmra.mrb[0].mxu0 %v587
    %v673 = vpop.f32.mrb[0].mxu0
    %v674 = vadd.f32 0.0, %v673
    %v675 = vpop.f32.mrb[0].mxu0
    %676 = vmatprep.mubr.f32.mxu0 0.0
    %677 = vmatmul.mubr.f32.gmra.mrb[0].mxu0 %v590
    %v678 = vpop.f32.mrb[0].mxu0
    %v679 = vadd.f32 0.0, %v678
    %v680 = vpop.f32.mrb[0].mxu0
    %681 = vmatprep.mubr.f32.mxu0 0.0
    %682 = vmatmul.mubr.f32.gmra.mrb[0].mxu0 %v593
    %v683 = vpop.f32.mrb[0].mxu0
    %v684 = vadd.f32 0.0, %v683
    %v685 = vpop.f32.mrb[0].mxu0
    %686 = vmatprep.mubr.f32.mxu0 0.0
    %687 = vmatmul.mubr.f32.gmra.mrb[0].mxu0 %v596
    %v688 = vpop.f32.mrb[0].mxu0
    %v689 = vadd.f32 0.0, %v688
    %v690 = vpop.f32.mrb[0].mxu0
    %691 = vdwg.mxu0
    %v692 = vpack.c.bf16 %v674, %v669
    %v693 = vpack.c.bf16 %v684, %v679
    %v694 = vpack.c.bf16 %v689, %v689
    %v695 = vld [vmem:[%s5] sm:$0xf]
    %v696 = vld [vmem:[%s5 + $0x4] sm:$0xf]
    %v697 = vld [vmem:[%s5 + $0x8] sm:$0xf]
    %v698 = vld [vmem:[%s5 + $0xc] sm:$0xf]
    %v699 = vld [vmem:[%s5 + $0x10] sm:$0xf]
    %v700 = vld [vmem:[%s5 + $0x14] sm:$0xf]
    %v701 = vld [vmem:[%s5 + $0x18] sm:$0xf]
    %v702 = vld [vmem:[%s5 + $0x1c] sm:$0xf]
    %v703 = vld [vmem:[%s5 + $0x20] sm:$0xf]
    %v704 = vld [vmem:[%s5 + $0x24] sm:$0xf]
    %v705 = vld [vmem:[%s5 + $0x28] sm:$0xf]
    %v706 = vld [vmem:[%s5 + $0x2c] sm:$0xf]
    %v707 = vld [vmem:[%s5 + $0x30] sm:$0xf]
    %v708 = vld [vmem:[%s5 + $0x34] sm:$0xf]
    %v709 = vld [vmem:[%s5 + $0x38] sm:$0xf]
    %v710 = vld [vmem:[%s5 + $0x3c] sm:$0xf]
    %v711 = vld [vmem:[%s5 + $0x40] sm:$0xf]
    %v712 = vld [vmem:[%s5 + $0x44] sm:$0xf]
    %v713 = vld [vmem:[%s5 + $0x48] sm:$0xf]
    %v714 = vld [vmem:[%s5 + $0x4c] sm:$0xf]
    %v715 = vld [vmem:[%s5 + $0x50] sm:$0xf]
    %v716 = vld [vmem:[%s5 + $0x54] sm:$0xf]
    %v717 = vld [vmem:[%s5 + $0x58] sm:$0xf]
    %v718 = vld [vmem:[%s5 + $0x5c] sm:$0xf]
    %v719 = vld [vmem:[%s6] sm:$0x1]
    %v721 = vshrl.u32 %v692, 16
    %v723 = vshll.u32 %v692, 16
    %v725 = vrot.slane %v723, 1
    %v726 = vor.u32 %v721, %v725
    %v728 = vshll.u32 %v693, 16
    %v730 = vrot.slane %v728, 1
    %v731 = vsel %vm115, %v726, %v730
    %v732 = vshrl.u32 %v693, 16
    %v734 = vor.u32 %v732, %v730
    %v736 = vshll.u32 %v694, 16
    %v738 = vrot.slane %v736, 1
    %v739 = vsel %vm115, %v734, %v738
    %v740 = vshrl.u32 %v694, 16
    %v742 = vor.u32 %v740, %v738
    %743 = vrot.lane.b32.xlu0 %v731, 64
    %v744 = vpop.permute.xlu0 %743
    %745 = vrot.lane.b32.xlu0 %v739, 64
    %v746 = vpop.permute.xlu0 %745
    %747 = vrot.lane.b32.xlu0 %v742, 64
    %v748 = vpop.permute.xlu0 %747
    %v752 = vrot.slane %v692, 1
    %v753 = vrot.slane %v693, 1
    %v754 = vsel %vm195, %v752, %v753
    %v755 = vrot.slane %v694, 1
    %v756 = vsel %vm195, %v753, %v755
    %v758 = vsel %vm244, %v692, %v744
    %v761 = vsel %vm244, %v693, %v746
    %v764 = vsel %vm244, %v694, %v748
    %v767 = vlaneseq
    %v768 = vshrl.u32 %v767, 7
    %v769 = vsub.s32 0, %v768
    %v770 = vrot.slane %v719, %v769
    %v796 = vunpack.c.l.b16 %v695
    %v797 = vunpack.c.l.b16 %v696
    %v798 = vunpack.c.l.b16 %v697
    %v799 = vunpack.c.l.b16 %v698
    %v800 = vunpack.c.l.b16 %v699
    %v801 = vunpack.c.l.b16 %v700
    %v802 = vunpack.c.l.b16 %v701
    %v803 = vunpack.c.l.b16 %v702
    %v804 = vunpack.c.l.b16 %v703
    %v805 = vunpack.c.l.b16 %v704
    %v806 = vunpack.c.l.b16 %v705
    %v807 = vunpack.c.l.b16 %v706
    %v808 = vunpack.c.l.b16 %v707
    %v809 = vunpack.c.l.b16 %v708
    %v810 = vunpack.c.l.b16 %v709
    %v811 = vunpack.c.l.b16 %v710
    %v812 = vunpack.c.l.b16 %v711
    %v813 = vunpack.c.l.b16 %v712
    %v814 = vunpack.c.l.b16 %v713
    %v815 = vunpack.c.l.b16 %v714
    %v816 = vunpack.c.l.b16 %v715
    %v817 = vunpack.c.l.b16 %v716
    %v818 = vunpack.c.l.b16 %v717
    %v819 = vunpack.c.l.b16 %v718
    %v820 = vpack.c.b16 %v797, %v796
    %v821 = vpack.c.b16 %v799, %v798
    %v822 = vpack.c.b16 %v801, %v800
    %v823 = vpack.c.b16 %v803, %v802
    %v824 = vpack.c.b16 %v805, %v804
    %v825 = vpack.c.b16 %v807, %v806
    %v826 = vpack.c.b16 %v809, %v808
    %v827 = vpack.c.b16 %v811, %v810
    %v828 = vpack.c.b16 %v813, %v812
    %v829 = vpack.c.b16 %v815, %v814
    %v830 = vpack.c.b16 %v817, %v816
    %v831 = vpack.c.b16 %v819, %v818
    %v845 = vsel %vm244, %v754, 0
    %v848 = vsel %vm244, %v756, 0
    %v851 = vsel %vm244, %v755, 0
    %853 = vmatprep.subr.bf16.mxu0 0
    %854 = vmatpush1.bf16.msra.mxu0 %v820
    %855 = vmatprep.subr.bf16.mxu0 0
    %856 = vmatpush1.bf16.msra.mxu0 %v821
    %857 = vmatprep.subr.bf16.mxu0 0
    %858 = vmatpush1.bf16.msra.mxu0 %v822
    %859 = vmatprep.subr.bf16.mxu0 0
    %860 = vmatpush1.bf16.msra.mxu0 %v823
    %861 = vmatprep.subr.bf16.mxu0 0
    %862 = vmatpush1.bf16.msra.mxu0 %v824
    %863 = vmatprep.subr.bf16.mxu0 0
    %864 = vmatpush1.bf16.msra.mxu0 %v825
    %865 = vmatprep.subr.bf16.mxu0 0
    %866 = vmatpush1.bf16.msra.mxu0 %v826
    %867 = vmatprep.subr.bf16.mxu0 0
    %868 = vmatpush1.bf16.msra.mxu0 %v827
    %869 = vmatprep.subr.bf16.mxu0 0
    %870 = vmatpush1.bf16.msra.mxu0 %v828
    %871 = vmatprep.subr.bf16.mxu0 0
    %872 = vmatpush1.bf16.msra.mxu0 %v829
    %873 = vmatprep.subr.bf16.mxu0 0
    %874 = vmatpush1.bf16.msra.mxu0 %v830
    %875 = vmatprep.subr.bf16.mxu0 0
    %876 = vmatpush1.bf16.msra.mxu0 %v831
    %877 = vmatprep.subr.bf16.mxu0 0
    %878 = vmatpush1.bf16.msra.mxu0 0
    %879 = vmatprep.subr.bf16.mxu0 0
    %880 = vmatpush1.bf16.msra.mxu0 0
    %881 = vmatprep.subr.bf16.mxu0 0
    %882 = vmatpush1.bf16.msra.mxu0 0
    %883 = vmatprep.subr.bf16.mxu0 0
    %884 = vmatpush1.bf16.msra.mxu0 0
    %885 = vmatprep.mubr.bf16.mxu0 %v845
    %886 = vmatmul.mubr.bf16.gmra.mrb[0].mxu0 %v758
    %v887 = vpop.f32.mrb[0].mxu0
    %v888 = vadd.f32 %v770, %v887
    %v889 = vpop.f32.mrb[0].mxu0
    %v890 = vpop.f32.mrb[0].mxu0
    %v891 = vadd.f32 %v770, %v890
    %v892 = vpop.f32.mrb[0].mxu0
    %893 = vmatprep.mubr.bf16.mxu0 %v848
    %894 = vmatmul.mubr.bf16.gmra.mrb[0].mxu0 %v761
    %v895 = vpop.f32.mrb[0].mxu0
    %v896 = vadd.f32 %v770, %v895
    %v897 = vpop.f32.mrb[0].mxu0
    %v898 = vpop.f32.mrb[0].mxu0
    %v899 = vadd.f32 %v770, %v898
    %v900 = vpop.f32.mrb[0].mxu0
    %901 = vmatprep.mubr.bf16.mxu0 %v851
    %902 = vmatmul.mubr.bf16.gmra.mrb[0].mxu0 %v764
    %v903 = vpop.f32.mrb[0].mxu0
    %v904 = vadd.f32 %v770, %v903
    %v905 = vpop.f32.mrb[0].mxu0
    %v906 = vpop.f32.mrb[0].mxu0
    %v907 = vpop.f32.mrb[0].mxu0
    %908 = vdwg.mxu0
    %v909 = vmax.f32 %v888, 0.0
    %v910 = vmax.f32 %v891, 0.0
    %v911 = vmax.f32 %v896, 0.0
    %v912 = vmax.f32 %v899, 0.0
    %v913 = vmax.f32 %v904, 0.0
    %v914 = vld [vmem:[%s2] sm:$0xff]
    %v915 = vld [vmem:[%s2 + $0x8] sm:$0xf]
    %v921 = vrot.slane %v909, 1
    %v922 = vrot.slane %v910, 1
    %v923 = vsel %vm454, %v921, %v922
    %v924 = vrot.slane %v911, 1
    %v925 = vsel %vm454, %v922, %v924
    %v926 = vrot.slane %v912, 1
    %v927 = vsel %vm454, %v924, %v926
    %v928 = vrot.slane %v913, 1
    %v929 = vsel %vm454, %v926, %v928
    %v935 = vmax.f32 %v909, %v923
    %v936 = vmax.f32 %v910, %v925
    %v937 = vmax.f32 %v911, %v927
    %v938 = vmax.f32 %v912, %v929
    %v939 = vmax.f32 %v913, %v928
    %v940 = vrot.slane %v909, 2
    %v941 = vrot.slane %v910, 2
    %v942 = vsel %vm518, %v940, %v941
    %v943 = vrot.slane %v911, 2
    %v944 = vsel %vm518, %v941, %v943
    %v945 = vrot.slane %v912, 2
    %v946 = vsel %vm518, %v943, %v945
    %v947 = vrot.slane %v913, 2
    %v948 = vsel %vm518, %v945, %v947
    %v954 = vmax.f32 %v935, %v942
    %v955 = vmax.f32 %v936, %v944
    %v956 = vmax.f32 %v937, %v946
    %v957 = vmax.f32 %v938, %v948
    %v958 = vmax.f32 %v939, %v947
    %vm959 = vcmask 293888
    %v961 = vsel %vm959, %v914, 0
    %v964 = vsel %vm959, %v915, 0
    %v967 = vsel %vm598, %v958, 0
    %969 = vmatprep.subr.mxu0 0.0
    %970 = vmatpush1.msra.mxu0 %v954
    %971 = vmatprep.subr.mxu0 0.0
    %972 = vmatpush1.msra.mxu0 %v955
    %973 = vmatprep.subr.mxu0 0.0
    %974 = vmatpush1.msra.mxu0 %v956
    %975 = vmatprep.subr.mxu0 0.0
    %976 = vmatpush1.msra.mxu0 %v957
    %977 = vmatprep.subr.mxu0 0.0
    %978 = vmatpush1.msra.mxu0 %v967
    %979 = vmatprep.subr.mxu0 0.0
    %980 = vmatpush1.msra.mxu0 0.0
    %981 = vmatprep.subr.mxu0 0.0
    %982 = vmatpush1.msra.mxu0 0.0
    %983 = vmatprep.subr.mxu0 0.0
    %984 = vmatpush1.msra.mxu0 0.0
    %985 = vmatprep.subr.mxu0 0.0
    %986 = vmatpush1.msra.mxu0 0.0
    %987 = vmatprep.subr.mxu0 0.0
    %988 = vmatpush1.msra.mxu0 0.0
    %989 = vmatprep.subr.mxu0 0.0
    %990 = vmatpush1.msra.mxu0 0.0
    %991 = vmatprep.subr.mxu0 0.0
    %992 = vmatpush1.msra.mxu0 0.0
    %993 = vmatprep.subr.mxu0 0.0
    %994 = vmatpush1.msra.mxu0 0.0
    %995 = vmatprep.subr.mxu0 0.0
    %996 = vmatpush1.msra.mxu0 0.0
    %997 = vmatprep.subr.mxu0 0.0
    %998 = vmatpush1.msra.mxu0 0.0
    %999 = vmatprep.subr.mxu0 0.0
    %1000 = vmatpush1.msra.mxu0 0.0
    %1001 = vmatprep.subr.mxu0 0.0
    %1002 = vmatpush1.msra.mxu0 0.0
    %1003 = vmatprep.subr.mxu0 0.0
    %1004 = vmatpush1.msra.mxu0 0.0
    %1005 = vmatprep.subr.mxu0 0.0
    %1006 = vmatpush1.msra.mxu0 0.0
    %1007 = vmatprep.subr.mxu0 0.0
    %1008 = vmatpush1.msra.mxu0 0.0
    %1009 = vmatprep.subr.mxu0 0.0
    %1010 = vmatpush1.msra.mxu0 0.0
    %1011 = vmatprep.subr.mxu0 0.0
    %1012 = vmatpush1.msra.mxu0 0.0
    %1013 = vmatprep.subr.mxu0 0.0
    %1014 = vmatpush1.msra.mxu0 0.0
    %1015 = vmatprep.subr.mxu0 0.0
    %1016 = vmatpush1.msra.mxu0 0.0
    %1017 = vmatprep.subr.mxu0 0.0
    %1018 = vmatpush1.msra.mxu0 0.0
    %1019 = vmatprep.subr.mxu0 0.0
    %1020 = vmatpush1.msra.mxu0 0.0
    %1021 = vmatprep.subr.mxu0 0.0
    %1022 = vmatpush1.msra.mxu0 0.0
    %1023 = vmatprep.subr.mxu0 0.0
    %1024 = vmatpush1.msra.mxu0 0.0
    %1025 = vmatprep.subr.mxu0 0.0
    %1026 = vmatpush1.msra.mxu0 0.0
    %1027 = vmatprep.subr.mxu0 0.0
    %1028 = vmatpush1.msra.mxu0 0.0
    %1029 = vmatprep.subr.mxu0 0.0
    %1030 = vmatpush1.msra.mxu0 0.0
    %1031 = vmatprep.subr.mxu0 0.0
    %1032 = vmatpush1.msra.mxu0 0.0
    %1033 = vmatprep.mubr.f32.mxu0 0.0
    %1034 = vmatmul.mubr.f32.gmra.mrb[0].mxu0 %v961
    %v1035 = vpop.f32.mrb[0].mxu0
    %v1036 = vadd.f32 0.0, %v1035
    %v1037 = vpop.f32.mrb[0].mxu0
    %1038 = vmatprep.mubr.f32.mxu0 0.0
    %1039 = vmatmul.mubr.f32.gmra.mrb[0].mxu0 %v964
    %v1040 = vpop.f32.mrb[0].mxu0
    %v1041 = vadd.f32 0.0, %v1040
    %v1042 = vpop.f32.mrb[0].mxu0
    %1043 = vdwg.mxu0
    %v1044 = vpack.c.bf16 %v1041, %v1036
    %v1045 = vld [vmem:[%s7] sm:$0xf]
    %v1046 = vld [vmem:[%s7 + $0x4] sm:$0xf]
    %v1047 = vld [vmem:[%s7 + $0x8] sm:$0xf]
    %v1048 = vld [vmem:[%s7 + $0xc] sm:$0xf]
    %v1049 = vld [vmem:[%s7 + $0x10] sm:$0xf]
    %v1050 = vld [vmem:[%s7 + $0x14] sm:$0xf]
    %v1051 = vld [vmem:[%s7 + $0x18] sm:$0xf]
    %v1052 = vld [vmem:[%s7 + $0x1c] sm:$0xf]
    %v1053 = vld [vmem:[%s7 + $0x20] sm:$0xf]
    %v1054 = vld [vmem:[%s7 + $0x24] sm:$0xf]
    %v1055 = vld [vmem:[%s7 + $0x28] sm:$0xf]
    %v1056 = vld [vmem:[%s7 + $0x2c] sm:$0xf]
    %v1057 = vld [vmem:[%s7 + $0x30] sm:$0xf]
    %v1058 = vld [vmem:[%s7 + $0x34] sm:$0xf]
    %v1059 = vld [vmem:[%s7 + $0x38] sm:$0xf]
    %v1060 = vld [vmem:[%s7 + $0x3c] sm:$0xf]
    %v1061 = vld [vmem:[%s7 + $0x40] sm:$0xf]
    %v1062 = vld [vmem:[%s7 + $0x44] sm:$0xf]
    %v1063 = vld [vmem:[%s7 + $0x48] sm:$0xf]
    %v1064 = vld [vmem:[%s7 + $0x4c] sm:$0xf]
    %v1065 = vld [vmem:[%s7 + $0x50] sm:$0xf]
    %v1066 = vld [vmem:[%s7 + $0x54] sm:$0xf]
    %v1067 = vld [vmem:[%s7 + $0x58] sm:$0xf]
    %v1068 = vld [vmem:[%s7 + $0x5c] sm:$0xf]
    %v1069 = vld [vmem:[%s8] sm:$0x1]
    %v1071 = vshrl.u32 %v1044, 16
    %v1073 = vshll.u32 %v1044, 16
    %v1075 = vrot.slane %v1073, 1
    %v1076 = vor.u32 %v1071, %v1075
    %1077 = vrot.lane.b32.xlu0 %v1076, 64
    %v1078 = vpop.permute.xlu0 %1077
    %v1080 = vrot.slane %v1044, 1
    %v1082 = vsel %vm244, %v1044, %v1078
    %v1085 = vlaneseq
    %v1086 = vshrl.u32 %v1085, 7
    %v1087 = vsub.s32 0, %v1086
    %v1088 = vrot.slane %v1069, %v1087
    %v1114 = vunpack.c.l.b16 %v1045
    %v1115 = vunpack.c.l.b16 %v1046
    %v1116 = vunpack.c.l.b16 %v1047
    %v1117 = vunpack.c.l.b16 %v1048
    %v1118 = vunpack.c.l.b16 %v1049
    %v1119 = vunpack.c.l.b16 %v1050
    %v1120 = vunpack.c.l.b16 %v1051
    %v1121 = vunpack.c.l.b16 %v1052
    %v1122 = vunpack.c.l.b16 %v1053
    %v1123 = vunpack.c.l.b16 %v1054
    %v1124 = vunpack.c.l.b16 %v1055
    %v1125 = vunpack.c.l.b16 %v1056
    %v1126 = vunpack.c.l.b16 %v1057
    %v1127 = vunpack.c.l.b16 %v1058
    %v1128 = vunpack.c.l.b16 %v1059
    %v1129 = vunpack.c.l.b16 %v1060
    %v1130 = vunpack.c.l.b16 %v1061
    %v1131 = vunpack.c.l.b16 %v1062
    %v1132 = vunpack.c.l.b16 %v1063
    %v1133 = vunpack.c.l.b16 %v1064
    %v1134 = vunpack.c.l.b16 %v1065
    %v1135 = vunpack.c.l.b16 %v1066
    %v1136 = vunpack.c.l.b16 %v1067
    %v1137 = vunpack.c.l.b16 %v1068
    %v1138 = vpack.c.b16 %v1115, %v1114
    %v1139 = vpack.c.b16 %v1117, %v1116
    %v1140 = vpack.c.b16 %v1119, %v1118
    %v1141 = vpack.c.b16 %v1121, %v1120
    %v1142 = vpack.c.b16 %v1123, %v1122
    %v1143 = vpack.c.b16 %v1125, %v1124
    %v1144 = vpack.c.b16 %v1127, %v1126
    %v1145 = vpack.c.b16 %v1129, %v1128
    %v1146 = vpack.c.b16 %v1131, %v1130
    %v1147 = vpack.c.b16 %v1133, %v1132
    %v1148 = vpack.c.b16 %v1135, %v1134
    %v1149 = vpack.c.b16 %v1137, %v1136
    %v1163 = vsel %vm244, %v1080, 0
    %1165 = vmatprep.subr.bf16.mxu0 0
    %1166 = vmatpush1.bf16.msra.mxu0 %v1138
    %1167 = vmatprep.subr.bf16.mxu0 0
    %1168 = vmatpush1.bf16.msra.mxu0 %v1139
    %1169 = vmatprep.subr.bf16.mxu0 0
    %1170 = vmatpush1.bf16.msra.mxu0 %v1140
    %1171 = vmatprep.subr.bf16.mxu0 0
    %1172 = vmatpush1.bf16.msra.mxu0 %v1141
    %1173 = vmatprep.subr.bf16.mxu0 0
    %1174 = vmatpush1.bf16.msra.mxu0 %v1142
    %1175 = vmatprep.subr.bf16.mxu0 0
    %1176 = vmatpush1.bf16.msra.mxu0 %v1143
    %1177 = vmatprep.subr.bf16.mxu0 0
    %1178 = vmatpush1.bf16.msra.mxu0 %v1144
    %1179 = vmatprep.subr.bf16.mxu0 0
    %1180 = vmatpush1.bf16.msra.mxu0 %v1145
    %1181 = vmatprep.subr.bf16.mxu0 0
    %1182 = vmatpush1.bf16.msra.mxu0 %v1146
    %1183 = vmatprep.subr.bf16.mxu0 0
    %1184 = vmatpush1.bf16.msra.mxu0 %v1147
    %1185 = vmatprep.subr.bf16.mxu0 0
    %1186 = vmatpush1.bf16.msra.mxu0 %v1148
    %1187 = vmatprep.subr.bf16.mxu0 0
    %1188 = vmatpush1.bf16.msra.mxu0 %v1149
    %1189 = vmatprep.subr.bf16.mxu0 0
    %1190 = vmatpush1.bf16.msra.mxu0 0
    %1191 = vmatprep.subr.bf16.mxu0 0
    %1192 = vmatpush1.bf16.msra.mxu0 0
    %1193 = vmatprep.subr.bf16.mxu0 0
    %1194 = vmatpush1.bf16.msra.mxu0 0
    %1195 = vmatprep.subr.bf16.mxu0 0
    %1196 = vmatpush1.bf16.msra.mxu0 0
    %1197 = vmatprep.mubr.bf16.mxu0 %v1163
    %1198 = vmatmul.mubr.bf16.gmra.mrb[0].mxu0 %v1082
    %v1199 = vpop.f32.mrb[0].mxu0
    %v1200 = vadd.f32 %v1088, %v1199
    %v1201 = vpop.f32.mrb[0].mxu0
    %v1202 = vpop.f32.mrb[0].mxu0
    %v1203 = vadd.f32 %v1088, %v1202
    %v1204 = vpop.f32.mrb[0].mxu0
    %1205 = vdwg.mxu0
    %v1206 = vmax.f32 %v1200, 0.0
    %v1207 = vmax.f32 %v1203, 0.0
    %vm1208 = vcmask 519168
    %v1209 = vsel %vm1208, %v1206, -inf
    %v1210 = vrot.slane %v1209, 4
    %v1211 = vmax.f32 %v1209, %v1210
    %v1212 = vrot.slane %v1211, 2
    %v1213 = vmax.f32 %v1211, %v1212
    %v1214 = vrot.slane %v1213, 1
    %v1215 = vmax.f32 %v1213, %v1214
    %vm1216 = vcmask 523270
    %v1217 = vsel %vm1216, %v1206, -inf
    %vm1218 = vcmask 517120
    %v1219 = vsel %vm1218, %v1207, -inf
    %v1220 = vmax.f32 %v1217, %v1219
    %v1221 = vrot.slane %v1220, 4
    %v1222 = vmax.f32 %v1220, %v1221
    %v1223 = vrot.slane %v1222, 2
    %v1224 = vmax.f32 %v1222, %v1223
    %v1225 = vrot.slane %v1224, 1
    %v1226 = vmax.f32 %v1224, %v1225
    %vm1227 = vcmask 1040384
    %v1228 = vsel %vm1227, %v1215, %v1226
    %v1230 = vrot.slane %v1228, 6
    %v1232 = vrot.slane %v1228, 4
    %v1234 = vrot.slane %v1228, 2
    %vm1236 = vcmask 1041408
    %v1237 = vsel %vm1236, %v1228, %v1230
    %v1238 = vsel %vm598, %v1237, %v1232
    %v1239 = vsel %vm518, %v1238, %v1234
    %v1240 = vld [vmem:[%s9] sm:$0xff]
    %v1241 = vld [vmem:[%s9 + $0x8] sm:$0xff]
    %v1242 = vld [vmem:[%s9 + $0x10] sm:$0xff]
    %v1243 = vld [vmem:[%s9 + $0x18] sm:$0xff]
    %v1244 = vld [vmem:[%s9 + $0x20] sm:$0xff]
    %v1245 = vld [vmem:[%s9 + $0x28] sm:$0xff]
    %v1246 = vld [vmem:[%s9 + $0x30] sm:$0xff]
    %v1247 = vld [vmem:[%s9 + $0x38] sm:$0xff]
    %v1248 = vld [vmem:[%s10] sm:$0x1]
    %v1250 = vlaneseq
    %v1251 = vshrl.u32 %v1250, 7
    %v1252 = vsub.s32 0, %v1251
    %v1253 = vrot.slane %v1248, %v1252
    %v1256 = vsel %vm244, %v1239, 0
    %1258 = vmatprep.subr.mxu0 0.0
    %1259 = vmatpush1.msra.mxu0 %v1240
    %1260 = vmatprep.subr.mxu0 0.0
    %1261 = vmatpush1.msra.mxu0 %v1241
    %1262 = vmatprep.subr.mxu0 0.0
    %1263 = vmatpush1.msra.mxu0 %v1242
    %1264 = vmatprep.subr.mxu0 0.0
    %1265 = vmatpush1.msra.mxu0 %v1243
    %1266 = vmatprep.subr.mxu0 0.0
    %1267 = vmatpush1.msra.mxu0 %v1244
    %1268 = vmatprep.subr.mxu0 0.0
    %1269 = vmatpush1.msra.mxu0 %v1245
    %1270 = vmatprep.subr.mxu0 0.0
    %1271 = vmatpush1.msra.mxu0 %v1246
    %1272 = vmatprep.subr.mxu0 0.0
    %1273 = vmatpush1.msra.mxu0 %v1247
    %1274 = vmatprep.subr.mxu0 0.0
    %1275 = vmatpush1.msra.mxu0 0.0
    %1276 = vmatprep.subr.mxu0 0.0
    %1277 = vmatpush1.msra.mxu0 0.0
    %1278 = vmatprep.subr.mxu0 0.0
    %1279 = vmatpush1.msra.mxu0 0.0
    %1280 = vmatprep.subr.mxu0 0.0
    %1281 = vmatpush1.msra.mxu0 0.0
    %1282 = vmatprep.subr.mxu0 0.0
    %1283 = vmatpush1.msra.mxu0 0.0
    %1284 = vmatprep.subr.mxu0 0.0
    %1285 = vmatpush1.msra.mxu0 0.0
    %1286 = vmatprep.subr.mxu0 0.0
    %1287 = vmatpush1.msra.mxu0 0.0
    %1288 = vmatprep.subr.mxu0 0.0
    %1289 = vmatpush1.msra.mxu0 0.0
    %1290 = vmatprep.subr.mxu0 0.0
    %1291 = vmatpush1.msra.mxu0 0.0
    %1292 = vmatprep.subr.mxu0 0.0
    %1293 = vmatpush1.msra.mxu0 0.0
    %1294 = vmatprep.subr.mxu0 0.0
    %1295 = vmatpush1.msra.mxu0 0.0
    %1296 = vmatprep.subr.mxu0 0.0
    %1297 = vmatpush1.msra.mxu0 0.0
    %1298 = vmatprep.subr.mxu0 0.0
    %1299 = vmatpush1.msra.mxu0 0.0
    %1300 = vmatprep.subr.mxu0 0.0
    %1301 = vmatpush1.msra.mxu0 0.0
    %1302 = vmatprep.subr.mxu0 0.0
    %1303 = vmatpush1.msra.mxu0 0.0
    %1304 = vmatprep.subr.mxu0 0.0
    %1305 = vmatpush1.msra.mxu0 0.0
    %1306 = vmatprep.subr.mxu0 0.0
    %1307 = vmatpush1.msra.mxu0 0.0
    %1308 = vmatprep.subr.mxu0 0.0
    %1309 = vmatpush1.msra.mxu0 0.0
    %1310 = vmatprep.subr.mxu0 0.0
    %1311 = vmatpush1.msra.mxu0 0.0
    %1312 = vmatprep.subr.mxu0 0.0
    %1313 = vmatpush1.msra.mxu0 0.0
    %1314 = vmatprep.subr.mxu0 0.0
    %1315 = vmatpush1.msra.mxu0 0.0
    %1316 = vmatprep.subr.mxu0 0.0
    %1317 = vmatpush1.msra.mxu0 0.0
    %1318 = vmatprep.subr.mxu0 0.0
    %1319 = vmatpush1.msra.mxu0 0.0
    %1320 = vmatprep.subr.mxu0 0.0
    %1321 = vmatpush1.msra.mxu0 0.0
    %1322 = vmatprep.mubr.f32.mxu0 0.0
    %1323 = vmatmul.mubr.f32.gmra.mrb[0].mxu0 %v1256
    %v1324 = vpop.f32.mrb[0].mxu0
    %v1325 = vadd.f32 %v1253, %v1324
    %v1326 = vpop.f32.mrb[0].mxu0
    %1327 = vdwg.mxu0
    %v1328 = vmax.f32 %v1325, 0.0
    %v1329 = vld [vmem:[%s11] sm:$0xff]
    %v1330 = vld [vmem:[%s11 + $0x8] sm:$0xff]
    %v1331 = vld [vmem:[%s11 + $0x10] sm:$0xff]
    %v1332 = vld [vmem:[%s11 + $0x18] sm:$0xff]
    %v1333 = vld [vmem:[%s12] sm:$0x1]
    %v1335 = vlaneseq
    %v1336 = vshrl.u32 %v1335, 7
    %v1337 = vsub.s32 0, %v1336
    %v1338 = vrot.slane %v1333, %v1337
    %v1341 = vsel %vm227, %v1328, 0
    %1343 = vmatprep.subr.mxu0 0.0
    %1344 = vmatpush1.msra.mxu0 %v1329
    %1345 = vmatprep.subr.mxu0 0.0
    %1346 = vmatpush1.msra.mxu0 %v1330
    %1347 = vmatprep.subr.mxu0 0.0
    %1348 = vmatpush1.msra.mxu0 %v1331
    %1349 = vmatprep.subr.mxu0 0.0
    %1350 = vmatpush1.msra.mxu0 %v1332
    %1351 = vmatprep.subr.mxu0 0.0
    %1352 = vmatpush1.msra.mxu0 0.0
    %1353 = vmatprep.subr.mxu0 0.0
    %1354 = vmatpush1.msra.mxu0 0.0
    %1355 = vmatprep.subr.mxu0 0.0
    %1356 = vmatpush1.msra.mxu0 0.0
    %1357 = vmatprep.subr.mxu0 0.0
    %1358 = vmatpush1.msra.mxu0 0.0
    %1359 = vmatprep.subr.mxu0 0.0
    %1360 = vmatpush1.msra.mxu0 0.0
    %1361 = vmatprep.subr.mxu0 0.0
    %1362 = vmatpush1.msra.mxu0 0.0
    %1363 = vmatprep.subr.mxu0 0.0
    %1364 = vmatpush1.msra.mxu0 0.0
    %1365 = vmatprep.subr.mxu0 0.0
    %1366 = vmatpush1.msra.mxu0 0.0
    %1367 = vmatprep.subr.mxu0 0.0
    %1368 = vmatpush1.msra.mxu0 0.0
    %1369 = vmatprep.subr.mxu0 0.0
    %1370 = vmatpush1.msra.mxu0 0.0
    %1371 = vmatprep.subr.mxu0 0.0
    %1372 = vmatpush1.msra.mxu0 0.0
    %1373 = vmatprep.subr.mxu0 0.0
    %1374 = vmatpush1.msra.mxu0 0.0
    %1375 = vmatprep.subr.mxu0 0.0
    %1376 = vmatpush1.msra.mxu0 0.0
    %1377 = vmatprep.subr.mxu0 0.0
    %1378 = vmatpush1.msra.mxu0 0.0
    %1379 = vmatprep.subr.mxu0 0.0
    %1380 = vmatpush1.msra.mxu0 0.0
    %1381 = vmatprep.subr.mxu0 0.0
    %1382 = vmatpush1.msra.mxu0 0.0
    %1383 = vmatprep.subr.mxu0 0.0
    %1384 = vmatpush1.msra.mxu0 0.0
    %1385 = vmatprep.subr.mxu0 0.0
    %1386 = vmatpush1.msra.mxu0 0.0
    %1387 = vmatprep.subr.mxu0 0.0
    %1388 = vmatpush1.msra.mxu0 0.0
    %1389 = vmatprep.subr.mxu0 0.0
    %1390 = vmatpush1.msra.mxu0 0.0
    %1391 = vmatprep.subr.mxu0 0.0
    %1392 = vmatpush1.msra.mxu0 0.0
    %1393 = vmatprep.subr.mxu0 0.0
    %1394 = vmatpush1.msra.mxu0 0.0
    %1395 = vmatprep.subr.mxu0 0.0
    %1396 = vmatpush1.msra.mxu0 0.0
    %1397 = vmatprep.subr.mxu0 0.0
    %1398 = vmatpush1.msra.mxu0 0.0
    %1399 = vmatprep.subr.mxu0 0.0
    %1400 = vmatpush1.msra.mxu0 0.0
    %1401 = vmatprep.subr.mxu0 0.0
    %1402 = vmatpush1.msra.mxu0 0.0
    %1403 = vmatprep.subr.mxu0 0.0
    %1404 = vmatpush1.msra.mxu0 0.0
    %1405 = vmatprep.subr.mxu0 0.0
    %1406 = vmatpush1.msra.mxu0 0.0
    %1407 = vmatprep.mubr.f32.mxu0 0.0
    %1408 = vmatmul.mubr.f32.gmra.mrb[0].mxu0 %v1341
    %v1409 = vpop.f32.mrb[0].mxu0
    %v1410 = vadd.f32 %v1338, %v1409
    %v1411 = vpop.f32.mrb[0].mxu0
    %1412 = vdwg.mxu0
    %v1413 = vsub.f32 0.0, %v1410
    %v1414 = vmul.f32 %v1413, 1.442695
    %v1415 = vpow.pop %v1414
    %v1416 = vadd.f32 %v1415, 1.0
    %v1417 = vrcp.pop %v1416
    %v1418 = vmul.f32 1.0, %v1417
    %1419 = vst [vmem:[#allocation2] sm:$0xff] %v1418
    // Predicated region
    $region54: #{tpu_custom_call.1} parent=1 // pred_check
      _
    $region55: #{tpu_custom_call.1} parent=1 // pred_check_branch
      %1421 = sbr.rel (0) target = $region57
    $region56: #{tpu_custom_call.1} parent=1 // pred_region
      %s1423 = ssub.s32 128, 128
      %1424 = vsyncadd [#allocation3], %s1423
      %s1426 = sshll.u32 [#allocation2], 4
      %s1427 = int_to_ptr.vmem [resolvable:$true] %s1426
      %1429 = dma.vmem_to_hbm [thread:$0]  %s1427, 128, %s13, [#allocation3]
    $region57: #{tpu_custom_call.1} parent=1 // pred_fallthru
      _
    // Predicated region
    $region58: #{tpu_custom_call.1} parent=1 // pred_check
      _
    $region59: #{tpu_custom_call.1} parent=1 // pred_check_branch
      %1431 = sbr.rel (0) target = $region61
    $region60: #{tpu_custom_call.1} parent=1 // pred_region
      %1432 = dma.done [#allocation3], 128
    $region61: #{tpu_custom_call.1} parent=1 // pred_fallthru
      _
    %1433 = vsyncpa [#allocation3], 1

</llo_original>
